<compile_context>
chip_gen: v5e
topology: v5e:2x2
jax: 0.10.0
libtpu: 0.0.40
codegen_flags: <defaults>
</compile_context>

<pallas_src>
import math

import jax
import jax.numpy as jnp
from jax.experimental import pallas as pl
from jax.experimental.pallas import tpu as pltpu


def _round_up(x, m):
    return ((x + m - 1) // m) * m


def _cdiv(a, b):
    return -(-a // b)


def _mlp_kernel(x_ref, w_ref, b_ref, o_ref, acc_ref):
    # x_ref:   (tm, tk)  input dtype (f32 or bf16) -- cast to W's dtype for the MXU
    # w_ref:   (tk, tn)  compute dtype (pre-transposed (K, N) weight, no in-kernel transpose)
    # b_ref:   (1, tn)   f32
    # o_ref:   (tm, tn)  out dtype
    # acc_ref: (tm, tn)  f32 scratch, resident across the K grid axis
    k = pl.program_id(2)

    @pl.when(k == 0)
    def _():
        acc_ref[...] = jnp.zeros_like(acc_ref)

    acc_ref[...] += jnp.dot(
        x_ref[...].astype(w_ref.dtype),
        w_ref[...],
        preferred_element_type=jnp.float32,
    )

    @pl.when(k == pl.num_programs(2) - 1)
    def _():
        y = acc_ref[...] + b_ref[...]          # bias broadcast over rows, f32
        y = jnp.where(y > 0, y, 0.1 * y)       # LeakyReLU(negative_slope=0.1), f32 epilogue
        o_ref[...] = y.astype(o_ref.dtype)
        # TODO(synk): nn.Dropout(p=0) is identity; no RNG dropout mask is applied.


def prepare_mlp_params(weight, bias, *, tn=512, tk=1024, compute_dtype=jnp.bfloat16):
    """One-time parameter preparation (do this at init, NOT per forward call).

    weight: (n_out, n_in) PyTorch Linear layout, bias: (n_out,).
    Returns a dict with the weight cast to `compute_dtype`, transposed to (n_in, n_out)
    = (K, N) and padded to lane-aligned tile multiples, plus the padded f32 bias.
    """
    n_out, n_in = weight.shape
    tk_ = min(tk, _round_up(n_in, 128))
    tn_ = min(tn, _round_up(n_out, 128))
    k_p = _round_up(n_in, tk_)
    n_p = _round_up(n_out, tn_)

    w_t = weight.T.astype(compute_dtype)                   # (K, N), bf16 in HBM
    if (k_p, n_p) != (n_in, n_out):
        w_t = jnp.pad(w_t, ((0, k_p - n_in), (0, n_p - n_out)))

    b2d = bias.astype(jnp.float32).reshape(1, n_out)
    if n_p != n_out:
        b2d = jnp.pad(b2d, ((0, 0), (0, n_p - n_out)))

    return {"w_t": w_t, "b": b2d, "n_in": n_in, "n_out": n_out, "tk": tk_, "tn": tn_}


def mlp_forward(x, params, *, tm=512, out_dtype=None):
    """x: (..., n_in) -> (..., n_out) using prepared params from `prepare_mlp_params`."""
    w_t = params["w_t"]
    b2d = params["b"]
    n_in = params["n_in"]
    n_out = params["n_out"]
    tk_ = params["tk"]
    tn_ = params["tn"]
    k_p, n_p = w_t.shape

    lead = x.shape[:-1]
    m = math.prod(lead) if lead else 1
    out_dtype = x.dtype if out_dtype is None else out_dtype

    if m == 0:
        return jnp.zeros((*lead, n_out), dtype=out_dtype)

    # Balanced M tile (multiple of 16 rows for bf16 sublane packing) -> minimal padding.
    n_m = _cdiv(m, tm)
    tm_ = min(_round_up(_cdiv(m, n_m), 16), _round_up(m, 16))
    m_p = _round_up(m, tm_)
    n_m = m_p // tm_
    n_n = n_p // tn_

    # v7x has 2 TensorCores: if the (M, N) output grid collapsed to a single tile,
    # split N so both cores get a "parallel" tile (when N allows it).
    if n_m * n_n == 1:
        c = n_p // 128
        if c >= 2:
            for s in (2, 3, c):
                if c % s == 0:
                    tn_ = (c // s) * 128
                    n_n = s
                    break

    cdt = w_t.dtype
    x2d = x.reshape(m, n_in)
    # Only pre-cast x to bf16 when it is streamed many times over the N grid; otherwise
    # the cast inside the kernel is cheaper than a standalone HBM read+write pass.
    if n_n > 3 and x2d.dtype != cdt:
        x2d = x2d.astype(cdt)
    if (m_p, k_p) != (m, n_in):
        x2d = jnp.pad(x2d, ((0, m_p - m), (0, k_p - n_in)))

    grid = (n_m, n_n, k_p // tk_)

    out = pl.pallas_call(
        _mlp_kernel,
        out_shape=jax.ShapeDtypeStruct((m_p, n_p), out_dtype),
        grid_spec=pltpu.PrefetchScalarGridSpec(
            num_scalar_prefetch=0,
            grid=grid,
            in_specs=[
                pl.BlockSpec((tm_, tk_), lambda i, j, k: (i, k)),   # x tile
                pl.BlockSpec((tk_, tn_), lambda i, j, k: (k, j)),   # W^T tile (K, N)
                pl.BlockSpec((1, tn_), lambda i, j, k: (0, j)),     # bias tile
            ],
            out_specs=pl.BlockSpec((tm_, tn_), lambda i, j, k: (i, j)),
            scratch_shapes=[pltpu.VMEM((tm_, tn_), jnp.float32)],
        ),
        compiler_params=pltpu.CompilerParams(
            dimension_semantics=("parallel", "parallel", "arbitrary"),
        ),
    )(x2d, w_t, b2d)

    return out[:m, :n_out].reshape(*lead, n_out)


def orthogonal_init(key, n_out, n_in, dtype=jnp.float32):
    """Deterministic equivalent of torch.nn.init.orthogonal_ for a (n_out, n_in) weight."""
    rows, cols = n_out, n_in
    a = jax.random.normal(key, (max(rows, cols), min(rows, cols)), dtype=jnp.float32)
    q, r = jnp.linalg.qr(a)
    q = q * jnp.sign(jnp.diagonal(r))
    if rows < cols:
        q = q.T
    return q[:rows, :cols].astype(dtype)


if __name__ == "__main__":
    key = jax.random.PRNGKey(0)
    k_x, k_w = jax.random.split(key)

    batch, seq, n_in, n_out = 2, 8, 32, 16
    x = jax.random.normal(k_x, (batch, seq, n_in), dtype=jnp.float32)

    weight = orthogonal_init(k_w, n_out, n_in)        # (n_out, n_in), orthogonal rows
    bias = jnp.zeros((n_out,), dtype=jnp.float32)     # zeros, per reset_parameters

    # One-time parameter prep (hoisted out of the hot path), then the forward call.
    params = prepare_mlp_params(weight, bias)
    y = mlp_forward(x, params)
    jax.block_until_ready(y)

    # Reference with the same bf16 operands / f32 accumulation as the kernel.
    ref = jnp.dot(x.astype(jnp.bfloat16), weight.astype(jnp.bfloat16).T,
                  preferred_element_type=jnp.float32) + bias
    ref = jnp.where(ref > 0, ref, 0.1 * ref).astype(x.dtype)

    assert y.shape == (batch, seq, n_out)
    assert jnp.allclose(y, ref, atol=1e-2, rtol=1e-2)

    # Loose check against full-f32 math to confirm module semantics
    # (bf16 MXU operands deviate slightly from PyTorch's f32 Linear).
    ref32 = x @ weight.T + bias
    ref32 = jnp.where(ref32 > 0, ref32, 0.1 * ref32)
    assert jnp.allclose(y, ref32, atol=5e-2, rtol=5e-2)

    print("KERNEL_OK")
</pallas_src>

<mosaic_0001>
module attributes {stable_mosaic.version = 11 : i64} {
  func.func @_mlp_kernel(%arg0: i32, %arg1: i32, %arg2: i32, %arg3: memref<16x128xf32, #tpu.memory_space<vmem>>, %arg4: memref<128x128xbf16, #tpu.memory_space<vmem>>, %arg5: memref<1x128xf32, #tpu.memory_space<vmem>>, %arg6: memref<16x128xf32, #tpu.memory_space<vmem>>, %arg7: memref<16x128xf32, #tpu.memory_space<vmem>>) attributes {dimension_semantics = [#tpu.dimension_semantics<parallel>, #tpu.dimension_semantics<parallel>, #tpu.dimension_semantics<arbitrary>], iteration_bounds = array<i64: 1, 1, 1>, scalar_prefetch = 0 : i64, scratch_operands = 1 : i64, tpu.core_type = #tpu.core_type<tc>, window_params = [{transform_indices = @transform_0, window_bounds = array<i64: 16, 128>}, {transform_indices = @transform_1, window_bounds = array<i64: 128, 128>}, {transform_indices = @transform_2, window_bounds = array<i64: 1, 128>}, {transform_indices = @transform_3, window_bounds = array<i64: 16, 128>}]} {
    %c0_i32 = arith.constant 0 : i32
    %0 = arith.cmpi eq, %arg2, %c0_i32 : i32
    %1 = arith.extui %0 : i1 to i32
    %c0_i32_0 = arith.constant 0 : i32
    %2 = arith.cmpi ne, %1, %c0_i32_0 : i32
    scf.if %2 {
      %cst_10 = arith.constant 0.000000e+00 : f32
      %13 = vector.broadcast %cst_10 : f32 to vector<16x128xf32>
      %c0_11 = arith.constant 0 : index
      %c0_12 = arith.constant 0 : index
      %14 = vector.load %arg7[%c0_11, %c0_12] : memref<16x128xf32, #tpu.memory_space<vmem>>, vector<16x128xf32>
      tpu.vector_store %arg7[%c0_11, %c0_12], %13 {strides = array<i32>} : memref<16x128xf32, #tpu.memory_space<vmem>>, vector<16x128xf32>,
    } else {
    }
    %c0 = arith.constant 0 : index
    %c0_1 = arith.constant 0 : index
    %3 = vector.load %arg7[%c0, %c0_1] : memref<16x128xf32, #tpu.memory_space<vmem>>, vector<16x128xf32>
    %c0_2 = arith.constant 0 : index
    %c0_3 = arith.constant 0 : index
    %4 = vector.load %arg3[%c0_2, %c0_3] : memref<16x128xf32, #tpu.memory_space<vmem>>, vector<16x128xf32>
    %5 = arith.truncf %4 : vector<16x128xf32> to vector<16x128xbf16>
    %c0_4 = arith.constant 0 : index
    %c0_5 = arith.constant 0 : index
    %6 = vector.load %arg4[%c0_4, %c0_5] : memref<128x128xbf16, #tpu.memory_space<vmem>>, vector<128x128xbf16>
    %cst = arith.constant dense<0.000000e+00> : vector<16x128xf32>
    %7 = tpu.matmul %5, %6, %cst {dimension_numbers = #tpu.dot_dimension_numbers<[1], [0], [0], [1], [0, 0, 1, 1], [], []>} : vector<16x128xbf16>, vector<128x128xbf16>, vector<16x128xf32> -> vector<16x128xf32>
    %8 = arith.addf %3, %7 : vector<16x128xf32>
    %c0_6 = arith.constant 0 : index
    %c0_7 = arith.constant 0 : index
    %9 = vector.load %arg7[%c0_6, %c0_7] : memref<16x128xf32, #tpu.memory_space<vmem>>, vector<16x128xf32>
    tpu.vector_store %arg7[%c0_6, %c0_7], %8 {strides = array<i32>} : memref<16x128xf32, #tpu.memory_space<vmem>>, vector<16x128xf32>,
    %c0_i32_8 = arith.constant 0 : i32
    %10 = arith.cmpi eq, %arg2, %c0_i32_8 : i32
    %11 = arith.extui %10 : i1 to i32
    %c0_i32_9 = arith.constant 0 : i32
    %12 = arith.cmpi ne, %11, %c0_i32_9 : i32
    scf.if %12 {
      %c0_10 = arith.constant 0 : index
      %c0_11 = arith.constant 0 : index
      %13 = vector.load %arg7[%c0_10, %c0_11] : memref<16x128xf32, #tpu.memory_space<vmem>>, vector<16x128xf32>
      %c0_12 = arith.constant 0 : index
      %c0_13 = arith.constant 0 : index
      %14 = vector.load %arg5[%c0_12, %c0_13] : memref<1x128xf32, #tpu.memory_space<vmem>>, vector<1x128xf32>
      %15 = vector.broadcast %14 : vector<1x128xf32> to vector<16x128xf32>
      %16 = arith.addf %13, %15 : vector<16x128xf32>
      %cst_14 = arith.constant 0.000000e+00 : f32
      %17 = vector.broadcast %cst_14 : f32 to vector<16x128xf32>
      %18 = arith.cmpf ogt, %16, %17 : vector<16x128xf32>
      %cst_15 = arith.constant 1.000000e-01 : f32
      %19 = vector.broadcast %cst_15 : f32 to vector<16x128xf32>
      %20 = arith.mulf %19, %16 : vector<16x128xf32>
      %21 = arith.select %18, %16, %20 : vector<16x128xi1>, vector<16x128xf32>
      %c0_16 = arith.constant 0 : index
      %c0_17 = arith.constant 0 : index
      %22 = vector.load %arg6[%c0_16, %c0_17] : memref<16x128xf32, #tpu.memory_space<vmem>>, vector<16x128xf32>
      tpu.vector_store %arg6[%c0_16, %c0_17], %21 {strides = array<i32>} : memref<16x128xf32, #tpu.memory_space<vmem>>, vector<16x128xf32>,
    } else {
    }
    return
  }
  func.func @transform_0(%arg0: i32, %arg1: i32, %arg2: i32) -> (i32, i32) {
    %c0_i32 = arith.constant 0 : i32
    return %arg0, %arg2 : i32, i32
  }
  func.func @transform_1(%arg0: i32, %arg1: i32, %arg2: i32) -> (i32, i32) {
    %c0_i32 = arith.constant 0 : i32
    return %arg2, %arg1 : i32, i32
  }
  func.func @transform_2(%arg0: i32, %arg1: i32, %arg2: i32) -> (i32, i32) {
    %c0_i32 = arith.constant 0 : i32
    %c0_i32_0 = arith.constant 0 : i32
    return %c0_i32, %arg1 : i32, i32
  }
  func.func @transform_3(%arg0: i32, %arg1: i32, %arg2: i32) -> (i32, i32) {
    %c0_i32 = arith.constant 0 : i32
    return %arg0, %arg1 : i32, i32
  }
}

</mosaic_0001>

<llo_original>
// kernel: tpu_custom_call.1
$region0: #{tpu_custom_call.1}
  #allocation0 [shape = 'u32[]', space=smem, size = 0x4, offset = 0x4, fixed_abs, tag = 'smem constant byte address 0x4 - core index']
  #allocation1 [shape = 'u32[72,128]{1,0:T(1,128)}', space=vmem, size = 0x9000, scoped, tag = 'internal scratch']
  #allocation2 [shape = 'f32[16,128]{1,0:T(8,128)}', space=vmem, size = 0x2000, scoped, tag = 'scratch operand']
  %s0 = inlined_call_operand.hbm [shape: f32[16,128], index: 0, kind: input, shape index: {}]
  %s1 = inlined_call_operand.hbm [shape: bf16[128,128], index: 1, kind: input, shape index: {}]
  %s2 = inlined_call_operand.vmem [shape: f32[1,128], index: 2, kind: input, shape index: {}]
  %s3 = inlined_call_operand.hbm [shape: f32[16,128], index: 3, kind: output, shape index: {}]
  %s4 = sld [smem:[#allocation0]]
  $region38: #{tpu_custom_call.1} parent=0
    _
  %s6 = ssub.s32 1, %s4
  %s7 = scalar_select 0, %s6, %s4
  $region1: #{tpu_custom_call.1} parent=0
    #allocation3 [shape = 'u8[8192]{0}', space=vmem, size = 0x2000, scoped, tag = 'input window, operand 0, single buffered']
    #allocation4 [shape = 's32[1]{0}', space=sflag, size = 0x4, scoped, tag = 'scoped memory for tpu_custom_call.1']
    #allocation5 [shape = 's32[1]{0}', space=sflag, size = 0x4, scoped, tag = 'scoped memory for tpu_custom_call.1']
    #allocation6 [shape = 'u8[32768]{0}', space=vmem, size = 0x8000, scoped, tag = 'input window, operand 1, single buffered']
    #allocation7 [shape = 's32[1]{0}', space=sflag, size = 0x4, scoped, tag = 'scoped memory for tpu_custom_call.1']
    #allocation8 [shape = 'u8[8192]{0}', space=vmem, size = 0x2000, scoped, tag = 'output window, operand 0, single buffered']
    %8 = vsyncpa [#allocation4], 0
    %9 = vsyncpa [#allocation7], 0
    %10 = vsyncpa [#allocation5], 0
    // Predicated region
    $region2: #{tpu_custom_call.1} parent=1 // pred_check
      _
    $region3: #{tpu_custom_call.1} parent=1 // pred_check_branch
      %12 = sbr.rel (0) target = $region5
    $region4: #{tpu_custom_call.1} parent=1 // pred_region
      %14 = vsyncadd [#allocation4], 0
      %s15 = sshll.u32 %s0, 4
      %s16 = int_to_ptr.hbm [resolvable:$true] %s15
      %s17 = sshll.u32 [#allocation3], 4
      %s18 = int_to_ptr.vmem [resolvable:$true] %s17
      %23 = dma.hbm_to_vmem [thread:$0]  %s16, 256, %s18, [#allocation4], 128, 128, 8
    $region5: #{tpu_custom_call.1} parent=1 // pred_fallthru
      _
    // Predicated region
    $region6: #{tpu_custom_call.1} parent=1 // pred_check
      _
    $region7: #{tpu_custom_call.1} parent=1 // pred_check_branch
      %25 = sbr.rel (0) target = $region9
    $region8: #{tpu_custom_call.1} parent=1 // pred_region
      %27 = vsyncadd [#allocation7], 0
      %s28 = sshll.u32 %s1, 4
      %s29 = int_to_ptr.hbm [resolvable:$true] %s28
      %s30 = sshll.u32 [#allocation6], 4
      %s31 = int_to_ptr.vmem [resolvable:$true] %s30
      %36 = dma.hbm_to_vmem [thread:$0]  %s29, 1024, %s31, [#allocation7], 64, 64, 4
    $region9: #{tpu_custom_call.1} parent=1 // pred_fallthru
      _
    // Predicated region
    $region10: #{tpu_custom_call.1} parent=1 // pred_check
      _
    $region11: #{tpu_custom_call.1} parent=1 // pred_check_branch
      %38 = sbr.rel (0) target = $region13
    $region12: #{tpu_custom_call.1} parent=1 // pred_region
      _
    $region13: #{tpu_custom_call.1} parent=1 // pred_fallthru
      _
    // Predicated region
    $region14: #{tpu_custom_call.1} parent=1 // pred_check
      _
    $region15: #{tpu_custom_call.1} parent=1 // pred_check_branch
      %40 = sbr.rel (0) target = $region17
    $region16: #{tpu_custom_call.1} parent=1 // pred_region
      %42 = dma.done [#allocation4], 256
    $region17: #{tpu_custom_call.1} parent=1 // pred_fallthru
      _
    // Predicated region
    $region18: #{tpu_custom_call.1} parent=1 // pred_check
      _
    $region19: #{tpu_custom_call.1} parent=1 // pred_check_branch
      %44 = sbr.rel (0) target = $region21
    $region20: #{tpu_custom_call.1} parent=1 // pred_region
      %46 = dma.done [#allocation7], 1024
    $region21: #{tpu_custom_call.1} parent=1 // pred_fallthru
      _
    %p47 = scmp.eq.s32.totalorder 0, 0
    // Predicated region
    $region22: #{tpu_custom_call.1} parent=1 // pred_check
      %p48 = pneg %p47
    $region23: #{tpu_custom_call.1} parent=1 // pred_check_branch
      %50 = sbr.rel (%p48) target = $region25
    $region24: #{tpu_custom_call.1} parent=1 // pred_region
      %51 = vst [vmem:[#allocation2] sm:$0xff] 0.0
      %52 = vst [vmem:[#allocation2 + $0x8] sm:$0xff] 0.0
    $region25: #{tpu_custom_call.1} parent=1 // pred_fallthru
      _
    %v53 = vld [vmem:[#allocation2] sm:$0xff]
    %v54 = vld [vmem:[#allocation2 + $0x8] sm:$0xff]
    %v55 = vld [vmem:[#allocation3] sm:$0xff]
    %v56 = vld [vmem:[#allocation3 + $0x8] sm:$0xff]
    %v57 = vpack.c.bf16 %v56, %v55
    %v58 = vld [vmem:[#allocation6] sm:$0xf]
    %v59 = vld [vmem:[#allocation6 + $0x4] sm:$0xf]
    %v60 = vld [vmem:[#allocation6 + $0x8] sm:$0xf]
    %v61 = vld [vmem:[#allocation6 + $0xc] sm:$0xf]
    %v62 = vld [vmem:[#allocation6 + $0x10] sm:$0xf]
    %v63 = vld [vmem:[#allocation6 + $0x14] sm:$0xf]
    %v64 = vld [vmem:[#allocation6 + $0x18] sm:$0xf]
    %v65 = vld [vmem:[#allocation6 + $0x1c] sm:$0xf]
    %v66 = vld [vmem:[#allocation6 + $0x20] sm:$0xf]
    %v67 = vld [vmem:[#allocation6 + $0x24] sm:$0xf]
    %v68 = vld [vmem:[#allocation6 + $0x28] sm:$0xf]
    %v69 = vld [vmem:[#allocation6 + $0x2c] sm:$0xf]
    %v70 = vld [vmem:[#allocation6 + $0x30] sm:$0xf]
    %v71 = vld [vmem:[#allocation6 + $0x34] sm:$0xf]
    %v72 = vld [vmem:[#allocation6 + $0x38] sm:$0xf]
    %v73 = vld [vmem:[#allocation6 + $0x3c] sm:$0xf]
    %v90 = vunpack.c.l.b16 %v58
    %v91 = vunpack.c.l.b16 %v59
    %v92 = vunpack.c.l.b16 %v60
    %v93 = vunpack.c.l.b16 %v61
    %v94 = vunpack.c.l.b16 %v62
    %v95 = vunpack.c.l.b16 %v63
    %v96 = vunpack.c.l.b16 %v64
    %v97 = vunpack.c.l.b16 %v65
    %v98 = vunpack.c.l.b16 %v66
    %v99 = vunpack.c.l.b16 %v67
    %v100 = vunpack.c.l.b16 %v68
    %v101 = vunpack.c.l.b16 %v69
    %v102 = vunpack.c.l.b16 %v70
    %v103 = vunpack.c.l.b16 %v71
    %v104 = vunpack.c.l.b16 %v72
    %v105 = vunpack.c.l.b16 %v73
    %v106 = vpack.c.b16 %v91, %v90
    %v107 = vpack.c.b16 %v93, %v92
    %v108 = vpack.c.b16 %v95, %v94
    %v109 = vpack.c.b16 %v97, %v96
    %v110 = vpack.c.b16 %v99, %v98
    %v111 = vpack.c.b16 %v101, %v100
    %v112 = vpack.c.b16 %v103, %v102
    %v113 = vpack.c.b16 %v105, %v104
    %122 = vmatpush.bf16.msra.mxu0 %v113
    %123 = vmatpush.bf16.msra.mxu0 %v112
    %124 = vmatpush.bf16.msra.mxu0 %v111
    %125 = vmatpush.bf16.msra.mxu0 %v110
    %126 = vmatpush.bf16.msra.mxu0 %v109
    %127 = vmatpush.bf16.msra.mxu0 %v108
    %128 = vmatpush.bf16.msra.mxu0 %v107
    %129 = vmatpush.bf16.msra.mxu0 %v106
    %130 = vmatmul.bf16.gmra.mxu0 %v57
    %v131 = vpop.f32.mrf.mxu0
    %v132 = vadd.f32 0.0, %v131
    %v133 = vpop.f32.mrf.mxu0
    %v134 = vadd.f32 0.0, %v133
    %135 = vdwg.mxu0
    %v136 = vadd.f32 %v53, %v132
    %v137 = vadd.f32 %v54, %v134
    %138 = vst [vmem:[#allocation2] sm:$0xff] %v136
    %139 = vst [vmem:[#allocation2 + $0x8] sm:$0xff] %v137
    // Predicated region
    $region26: #{tpu_custom_call.1} parent=1 // pred_check
      %p140 = pneg %p47
    $region27: #{tpu_custom_call.1} parent=1 // pred_check_branch
      %142 = sbr.rel (%p140) target = $region29
    $region28: #{tpu_custom_call.1} parent=1 // pred_region
      %v143 = vld [vmem:[#allocation2] sm:$0xff]
      %v144 = vld [vmem:[#allocation2 + $0x8] sm:$0xff]
      %v145 = vld [vmem:[%s2] sm:$0x1]
      %v147 = vperm.slane %v145, 0
      %v149 = vadd.f32 %v143, %v147
      %v150 = vadd.f32 %v144, %v147
      %vm151 = vcmp.gt.f32.partialorder %v149, 0.0
      %vm152 = vcmp.gt.f32.partialorder %v150, 0.0
      %v153 = vmul.f32 %v149, 0.1
      %v154 = vmul.f32 %v150, 0.1
      %v155 = vsel %vm151, %v149, %v153
      %v156 = vsel %vm152, %v150, %v154
      %157 = vst [vmem:[#allocation8] sm:$0xff] %v155
      %158 = vst [vmem:[#allocation8 + $0x8] sm:$0xff] %v156
    $region29: #{tpu_custom_call.1} parent=1 // pred_fallthru
      _
    // Predicated region
    $region30: #{tpu_custom_call.1} parent=1 // pred_check
      _
    $region31: #{tpu_custom_call.1} parent=1 // pred_check_branch
      %160 = sbr.rel (0) target = $region33
    $region32: #{tpu_custom_call.1} parent=1 // pred_region
      %162 = vsyncadd [#allocation5], 0
      %s163 = sshll.u32 [#allocation8], 4
      %s164 = int_to_ptr.vmem [resolvable:$true] %s163
      %s165 = sshll.u32 %s3, 4
      %s166 = int_to_ptr.hbm [resolvable:$true] %s165
      %171 = dma.vmem_to_hbm [thread:$0]  %s164, 256, %s166, [#allocation5], 128, 128, 8
    $region33: #{tpu_custom_call.1} parent=1 // pred_fallthru
      _
    // Predicated region
    $region34: #{tpu_custom_call.1} parent=1 // pred_check
      _
    $region35: #{tpu_custom_call.1} parent=1 // pred_check_branch
      %173 = sbr.rel (0) target = $region37
    $region36: #{tpu_custom_call.1} parent=1 // pred_region
      %175 = dma.done [#allocation5], 256
    $region37: #{tpu_custom_call.1} parent=1 // pred_fallthru
      _
    %176 = vsyncpa [#allocation4], 1
    %177 = vsyncpa [#allocation7], 1
    %178 = vsyncpa [#allocation5], 1

</llo_original>
